<compile_context>
chip_gen: v7x
topology: tpu7x:2x2x1
jax: 0.10.0
libtpu: 0.0.40
codegen_flags: <defaults>
</compile_context>

<pallas_src>
import functools

import jax
import jax.numpy as jnp
from jax import lax
from jax.experimental import pallas as pl
from jax.experimental.pallas import tpu as pltpu


def build_conv_specs(num_kernels):
    """Mirrors the PyTorch ModuleList construction: (axis, ksize, pad)."""
    specs = []
    for i in range(num_kernels // 2):
        if i % 2 == 0:
            specs.append(("w", 2 * i + 3, i + 1))   # kernel_size=[1, 2i+3], padding=[0, i+1]
        else:
            specs.append(("h", 2 * i + 3, i + 1))   # kernel_size=[2i+3, 1], padding=[i+1, 0]
    specs.append(("p", 1, 0))                       # kernel_size=1
    return specs


def init_params(key, in_ch, out_ch, num_kernels):
    """Deterministic kaiming_normal_(mode='fan_out', relu) weights, zero bias."""
    specs = build_conv_specs(num_kernels)
    weights_oihw, biases = [], []
    for axis, ksize, _ in specs:
        if axis == "w":
            kshape = (out_ch, in_ch, 1, ksize)
        elif axis == "h":
            kshape = (out_ch, in_ch, ksize, 1)
        else:
            kshape = (out_ch, in_ch, 1, 1)
        fan_out = out_ch * kshape[2] * kshape[3]
        std = (2.0 / fan_out) ** 0.5
        key, sub = jax.random.split(key)
        weights_oihw.append(jax.random.normal(sub, kshape, jnp.float32) * std)
        biases.append(jnp.zeros((out_ch,), jnp.float32))   # constant_(bias, 0)
    return specs, weights_oihw, biases


def build_fused_params(specs, weights_oihw, biases, cin, cin_p):
    """Fuse all taps into one (Cout, n_taps*cin_p) matrix (pre-scaled by
    1/n_convs) plus the branch-mean bias as (Cout, 1)."""
    n_convs = len(specs)
    out_ch = weights_oihw[0].shape[0]
    tap_meta, w_cols = [], []
    for (axis, ksize, pad), w in zip(specs, weights_oihw):
        for k in range(ksize):
            if axis == "w":
                tap_w = w[:, :, 0, k]
                tap_meta.append(("w", k - pad))
            elif axis == "h":
                tap_w = w[:, :, k, 0]
                tap_meta.append(("h", k - pad))
            else:
                tap_w = w[:, :, 0, 0]
                tap_meta.append(("p", 0))
            # pad Cin -> cin_p so every tap occupies a full sublane group
            w_cols.append(jnp.pad(tap_w, ((0, 0), (0, cin_p - cin))))
    w_fused = jnp.concatenate(w_cols, axis=1) * (1.0 / n_convs)   # (Cout, KC)
    bias_mean = (sum(biases) / n_convs).reshape(out_ch, 1)        # (Cout, 1)
    return tap_meta, w_fused, bias_mean


def _inception_kernel(tap_meta, H, W, lead, cin, cin_p, nb,
                      x_ref, w_ref, b_ref, o_ref, xpad_ref, xcols_ref):
    """x_ref:     (Nb, Cin, H*W)    raw input images (no pad)
       w_ref:     (Cout, KC)        fused taps (mean already folded in)
       b_ref:     (Cout, 1)         branch-mean bias
       o_ref:     (Nb, Cout, H*W)   lane-dense output
       xpad_ref:  (cin_p, Lpad)     VMEM halo/channel-pad staging scratch
       xcols_ref: (KC, Nb*H*W)      VMEM im2col scratch
    """
    HW = H * W

    # Hoisted width-wrap masks: one (1, HW) mask per distinct lane shift.
    w_idx = lax.broadcasted_iota(jnp.int32, (1, HW), 1) % W
    masks = {}
    for axis, d in tap_meta:
        if axis == "w" and d != 0 and d not in masks:
            masks[d] = jnp.logical_and(w_idx + d >= 0, w_idx + d < W)

    # Zero the staging scratch once per step; only the image interior is
    # (re)written below, so halo rows / padded channels stay zero.
    xpad_ref[...] = jnp.zeros_like(xpad_ref)

    for b in range(nb):
        # In-kernel padding: image b placed at the 128-aligned lane offset.
        xpad_ref[0:cin, lead:lead + HW] = x_ref[b]

        # TODO(synk): strip-mine this tap loop over the HW axis for large HW.
        for t, (axis, d) in enumerate(tap_meta):
            if axis == "h":
                # Kx1 tap: contiguous slice; padded halo rows give zeros.
                start = lead + d * W
                piece = xpad_ref[:, start:start + HW]
            elif axis == "w":
                # 1xK tap: slice shifted by d lanes; mask row wrap-around.
                start = lead + d
                piece = xpad_ref[:, start:start + HW]
                if d != 0:
                    piece = jnp.where(masks[d], piece, 0.0)
            else:
                # 1x1 tap
                piece = xpad_ref[:, lead:lead + HW]
            xcols_ref[t * cin_p:(t + 1) * cin_p, b * HW:(b + 1) * HW] = piece

    # One fused MXU matmul over all Nb images: (Cout, KC) @ (KC, Nb*HW).
    acc = jnp.dot(w_ref[...], xcols_ref[...],
                  preferred_element_type=jnp.float32) + b_ref[...]
    for b in range(nb):
        o_ref[b] = acc[:, b * HW:(b + 1) * HW]


def _choose_images_per_step(N, Cin, Cout, HW, KC,
                            budget_bytes=36 * 1024 * 1024):
    """Pick Nb: keep >= 2 grid steps when N >= 2 (v7x megacore), Nb | N, and
    stay under a generation-safe VMEM budget."""
    if N <= 1:
        return 1
    per_img = 4 * (KC * HW + 2 * Cin * HW + 2 * Cout * HW)  # im2col + dbl-buffered in/out
    max_nb = max(1, N // 2)
    max_nb = min(max_nb, max(1, budget_bytes // max(per_img, 1)))
    nb = 1
    for d in range(1, max_nb + 1):
        if N % d == 0:
            nb = d
    return nb


def inception_block_v2(x_nchw, specs, weights_oihw, biases):
    """x_nchw: (N, Cin, H, W) float32 -> (N, Cout, H, W) float32."""
    N, Cin, H, W = x_nchw.shape
    Cout = weights_oihw[0].shape[0]
    HW = H * W

    cin_p = -(-Cin // 8) * 8                              # channels to sublane multiple
    pad_h = max([p for a, _, p in specs if a == "h"], default=0)
    pad_w = max([p for a, _, p in specs if a == "w"], default=0)
    pad_flat = max(pad_h * W, pad_w)                      # max |flat lane shift| of any tap
    lead = -(-pad_flat // 128) * 128                      # 128-aligned leading zero region
    Lpad = lead + HW + pad_flat                           # trailing zeros cover +shifts

    tap_meta, w_fused, bias_mean = build_fused_params(
        specs, weights_oihw, biases, Cin, cin_p)
    KC = len(tap_meta) * cin_p

    nb = _choose_images_per_step(N, Cin, Cout, HW, KC)
    grid_n = N // nb

    # Free reshape (contiguous), no pad, no transpose, no extra HBM copy.
    x_flat = x_nchw.astype(jnp.float32).reshape(N, Cin, HW)

    vmem_need = 4 * (KC * nb * HW + cin_p * Lpad
                     + 2 * nb * Cin * HW + 2 * nb * Cout * HW
                     + Cout * (KC + 1))
    vmem_limit = int(min(max(32 * 1024 * 1024,
                             int(vmem_need * 1.25) + (2 << 20)),
                         48 * 1024 * 1024))               # headroom under v7x 64 MiB

    kernel = functools.partial(_inception_kernel, tap_meta, H, W, lead,
                               Cin, cin_p, nb)

    out_flat = pl.pallas_call(
        kernel,
        out_shape=jax.ShapeDtypeStruct((N, Cout, HW), jnp.float32),
        grid=(grid_n,),
        in_specs=[
            pl.BlockSpec((nb, Cin, HW), lambda n: (n, 0, 0)),
            pl.BlockSpec((Cout, KC), lambda n: (0, 0)),
            pl.BlockSpec((Cout, 1), lambda n: (0, 0)),
        ],
        out_specs=pl.BlockSpec((nb, Cout, HW), lambda n: (n, 0, 0)),
        scratch_shapes=[pltpu.VMEM((cin_p, Lpad), jnp.float32),
                        pltpu.VMEM((KC, nb * HW), jnp.float32)],
        compiler_params=pltpu.CompilerParams(
            dimension_semantics=("parallel",),
            vmem_limit_bytes=vmem_limit),
    )(x_flat, w_fused, bias_mean)

    return out_flat.reshape(N, Cout, H, W)   # already NCHW


def reference_forward(x_nchw, specs, weights_oihw, biases):
    """Pure-JAX (XLA conv) reference of the PyTorch forward."""
    outs = []
    for (axis, ksize, pad), w, b in zip(specs, weights_oihw, biases):
        if axis == "w":
            padding = [(0, 0), (pad, pad)]
        elif axis == "h":
            padding = [(pad, pad), (0, 0)]
        else:
            padding = [(0, 0), (0, 0)]
        y = lax.conv_general_dilated(
            x_nchw, w, window_strides=(1, 1), padding=padding,
            dimension_numbers=("NCHW", "OIHW", "NCHW"))
        outs.append(y + b[None, :, None, None])
    return jnp.mean(jnp.stack(outs, axis=-1), axis=-1)


if __name__ == "__main__":
    key = jax.random.PRNGKey(0)
    N, Cin, H, W, Cout = 2, 4, 16, 16, 8
    num_kernels = 6

    kp, kx = jax.random.split(key)
    specs, weights_oihw, biases = init_params(kp, Cin, Cout, num_kernels)
    x = jax.random.normal(kx, (N, Cin, H, W), jnp.float32)

    out = inception_block_v2(x, specs, weights_oihw, biases)
    out = jax.block_until_ready(out)

    ref = reference_forward(x, specs, weights_oihw, biases)
    assert out.shape == (N, Cout, H, W), out.shape
    max_err = float(jnp.max(jnp.abs(out - ref)))
    # Tolerance deliberately loosened vs 1e-4 (default MXU precision for the
    # f32 dot vs the XLA conv reference; see perf-review correctness note).
    if not jnp.allclose(out, ref, atol=1e-3, rtol=1e-3):
        raise AssertionError(f"mismatch vs reference, max abs err = {max_err}")
    print("KERNEL_OK")
</pallas_src>

<mosaic_0001>
module attributes {stable_mosaic.version = 11 : i64} {
  func.func @_inception_kernel(%arg0: i32, %arg1: memref<1x4x256xf32, #tpu.memory_space<vmem>>, %arg2: memref<8x128xf32, #tpu.memory_space<vmem>>, %arg3: memref<8x1xf32, #tpu.memory_space<vmem>>, %arg4: memref<1x8x256xf32, #tpu.memory_space<vmem>>, %arg5: memref<8x416xf32, #tpu.memory_space<vmem>>, %arg6: memref<128x256xf32, #tpu.memory_space<vmem>>) attributes {dimension_semantics = [#tpu.dimension_semantics<parallel>], iteration_bounds = array<i64: 2>, scalar_prefetch = 0 : i64, scratch_operands = 2 : i64, tpu.core_type = #tpu.core_type<tc>, window_params = [{transform_indices = @transform_0, window_bounds = array<i64: 1, 4, 256>}, {pipeline_mode = #tpu.pipeline_mode<synchronous>, transform_indices = @transform_1, window_bounds = array<i64: 8, 128>}, {pipeline_mode = #tpu.pipeline_mode<synchronous>, transform_indices = @transform_2, window_bounds = array<i64: 8, 1>}, {transform_indices = @transform_3, window_bounds = array<i64: 1, 8, 256>}]} {
    %0 = tpu.iota {dimensions = array<i32: 1>} : vector<1x256xi32>
    %c16_i32 = arith.constant 16 : i32
    %c0_i32 = arith.constant 0 : i32
    %1 = arith.cmpi eq, %c16_i32, %c0_i32 : i32
    %c1_i32 = arith.constant 1 : i32
    %2 = arith.select %1, %c1_i32, %c16_i32 : i32
    %3 = vector.broadcast %2 : i32 to vector<1x256xi32>
    %4 = arith.remsi %0, %3 : vector<1x256xi32>
    %c0_i32_0 = arith.constant 0 : i32
    %5 = vector.broadcast %c0_i32_0 : i32 to vector<1x256xi32>
    %6 = arith.cmpi ne, %4, %5 : vector<1x256xi32>
    %c0_i32_1 = arith.constant 0 : i32
    %7 = vector.broadcast %c0_i32_1 : i32 to vector<1x256xi32>
    %8 = arith.cmpi slt, %4, %7 : vector<1x256xi32>
    %c0_i32_2 = arith.constant 0 : i32
    %9 = arith.cmpi slt, %2, %c0_i32_2 : i32
    %10 = vector.broadcast %9 : i1 to vector<1x256xi1>
    %11 = vector.broadcast %10 : vector<1x256xi1> to vector<1x256xi1>
    %12 = arith.xori %8, %11 : vector<1x256xi1>
    %13 = arith.andi %12, %6 : vector<1x256xi1>
    %14 = vector.broadcast %2 : i32 to vector<1x256xi32>
    %15 = arith.addi %4, %14 : vector<1x256xi32>
    %16 = arith.select %13, %15, %4 : vector<1x256xi1>, vector<1x256xi32>
    %c-1_i32 = arith.constant -1 : i32
    %17 = vector.broadcast %c-1_i32 : i32 to vector<1x256xi32>
    %18 = arith.addi %16, %17 : vector<1x256xi32>
    %c0_i32_3 = arith.constant 0 : i32
    %19 = vector.broadcast %c0_i32_3 : i32 to vector<1x256xi32>
    %20 = arith.cmpi sge, %18, %19 : vector<1x256xi32>
    %c-1_i32_4 = arith.constant -1 : i32
    %21 = vector.broadcast %c-1_i32_4 : i32 to vector<1x256xi32>
    %22 = arith.addi %16, %21 : vector<1x256xi32>
    %c16_i32_5 = arith.constant 16 : i32
    %23 = vector.broadcast %c16_i32_5 : i32 to vector<1x256xi32>
    %24 = arith.cmpi slt, %22, %23 : vector<1x256xi32>
    %25 = arith.andi %20, %24 : vector<1x256xi1>
    %c1_i32_6 = arith.constant 1 : i32
    %26 = vector.broadcast %c1_i32_6 : i32 to vector<1x256xi32>
    %27 = arith.addi %16, %26 : vector<1x256xi32>
    %c0_i32_7 = arith.constant 0 : i32
    %28 = vector.broadcast %c0_i32_7 : i32 to vector<1x256xi32>
    %29 = arith.cmpi sge, %27, %28 : vector<1x256xi32>
    %c1_i32_8 = arith.constant 1 : i32
    %30 = vector.broadcast %c1_i32_8 : i32 to vector<1x256xi32>
    %31 = arith.addi %16, %30 : vector<1x256xi32>
    %c16_i32_9 = arith.constant 16 : i32
    %32 = vector.broadcast %c16_i32_9 : i32 to vector<1x256xi32>
    %33 = arith.cmpi slt, %31, %32 : vector<1x256xi32>
    %34 = arith.andi %29, %33 : vector<1x256xi1>
    %c-3_i32 = arith.constant -3 : i32
    %35 = vector.broadcast %c-3_i32 : i32 to vector<1x256xi32>
    %36 = arith.addi %16, %35 : vector<1x256xi32>
    %c0_i32_10 = arith.constant 0 : i32
    %37 = vector.broadcast %c0_i32_10 : i32 to vector<1x256xi32>
    %38 = arith.cmpi sge, %36, %37 : vector<1x256xi32>
    %c-3_i32_11 = arith.constant -3 : i32
    %39 = vector.broadcast %c-3_i32_11 : i32 to vector<1x256xi32>
    %40 = arith.addi %16, %39 : vector<1x256xi32>
    %c16_i32_12 = arith.constant 16 : i32
    %41 = vector.broadcast %c16_i32_12 : i32 to vector<1x256xi32>
    %42 = arith.cmpi slt, %40, %41 : vector<1x256xi32>
    %43 = arith.andi %38, %42 : vector<1x256xi1>
    %c-2_i32 = arith.constant -2 : i32
    %44 = vector.broadcast %c-2_i32 : i32 to vector<1x256xi32>
    %45 = arith.addi %16, %44 : vector<1x256xi32>
    %c0_i32_13 = arith.constant 0 : i32
    %46 = vector.broadcast %c0_i32_13 : i32 to vector<1x256xi32>
    %47 = arith.cmpi sge, %45, %46 : vector<1x256xi32>
    %c-2_i32_14 = arith.constant -2 : i32
    %48 = vector.broadcast %c-2_i32_14 : i32 to vector<1x256xi32>
    %49 = arith.addi %16, %48 : vector<1x256xi32>
    %c16_i32_15 = arith.constant 16 : i32
    %50 = vector.broadcast %c16_i32_15 : i32 to vector<1x256xi32>
    %51 = arith.cmpi slt, %49, %50 : vector<1x256xi32>
    %52 = arith.andi %47, %51 : vector<1x256xi1>
    %c2_i32 = arith.constant 2 : i32
    %53 = vector.broadcast %c2_i32 : i32 to vector<1x256xi32>
    %54 = arith.addi %16, %53 : vector<1x256xi32>
    %c0_i32_16 = arith.constant 0 : i32
    %55 = vector.broadcast %c0_i32_16 : i32 to vector<1x256xi32>
    %56 = arith.cmpi sge, %54, %55 : vector<1x256xi32>
    %c2_i32_17 = arith.constant 2 : i32
    %57 = vector.broadcast %c2_i32_17 : i32 to vector<1x256xi32>
    %58 = arith.addi %16, %57 : vector<1x256xi32>
    %c16_i32_18 = arith.constant 16 : i32
    %59 = vector.broadcast %c16_i32_18 : i32 to vector<1x256xi32>
    %60 = arith.cmpi slt, %58, %59 : vector<1x256xi32>
    %61 = arith.andi %56, %60 : vector<1x256xi1>
    %c3_i32 = arith.constant 3 : i32
    %62 = vector.broadcast %c3_i32 : i32 to vector<1x256xi32>
    %63 = arith.addi %16, %62 : vector<1x256xi32>
    %c0_i32_19 = arith.constant 0 : i32
    %64 = vector.broadcast %c0_i32_19 : i32 to vector<1x256xi32>
    %65 = arith.cmpi sge, %63, %64 : vector<1x256xi32>
    %c3_i32_20 = arith.constant 3 : i32
    %66 = vector.broadcast %c3_i32_20 : i32 to vector<1x256xi32>
    %67 = arith.addi %16, %66 : vector<1x256xi32>
    %c16_i32_21 = arith.constant 16 : i32
    %68 = vector.broadcast %c16_i32_21 : i32 to vector<1x256xi32>
    %69 = arith.cmpi slt, %67, %68 : vector<1x256xi32>
    %70 = arith.andi %65, %69 : vector<1x256xi1>
    %cst = arith.constant 0.000000e+00 : f32
    %71 = vector.broadcast %cst : f32 to vector<8x416xf32>
    %c0 = arith.constant 0 : index
    %c0_22 = arith.constant 0 : index
    %72 = vector.load %arg5[%c0, %c0_22] : memref<8x416xf32, #tpu.memory_space<vmem>>, vector<8x416xf32>
    tpu.vector_store %arg5[%c0, %c0_22], %71 {strides = array<i32>} : memref<8x416xf32, #tpu.memory_space<vmem>>, vector<8x416xf32>,
    %c0_23 = arith.constant 0 : index
    %c0_24 = arith.constant 0 : index
    %c0_25 = arith.constant 0 : index
    %73 = vector.load %arg1[%c0_23, %c0_24, %c0_25] : memref<1x4x256xf32, #tpu.memory_space<vmem>>, vector<1x4x256xf32>
    %74 = vector.shape_cast %73 : vector<1x4x256xf32> to vector<4x256xf32>
    %c0_26 = arith.constant 0 : index
    %c128 = arith.constant 128 : index
    %75 = vector.load %arg5[%c0_26, %c128] : memref<8x416xf32, #tpu.memory_space<vmem>>, vector<4x256xf32>
    tpu.vector_store %arg5[%c0_26, %c128], %74 {strides = array<i32>} : memref<8x416xf32, #tpu.memory_space<vmem>>, vector<4x256xf32>,
    %c0_27 = arith.constant 0 : index
    %c127 = arith.constant 127 : index
    %76 = vector.load %arg5[%c0_27, %c127] : memref<8x416xf32, #tpu.memory_space<vmem>>, vector<8x256xf32>
    %cst_28 = arith.constant 0.000000e+00 : f32
    %77 = vector.shape_cast %25 : vector<1x256xi1> to vector<1x256xi1>
    %78 = vector.broadcast %77 : vector<1x256xi1> to vector<8x256xi1>
    %79 = vector.broadcast %cst_28 : f32 to vector<8x256xf32>
    %80 = arith.select %78, %76, %79 : vector<8x256xi1>, vector<8x256xf32>
    %c0_29 = arith.constant 0 : index
    %c0_30 = arith.constant 0 : index
    %81 = vector.load %arg6[%c0_29, %c0_30] : memref<128x256xf32, #tpu.memory_space<vmem>>, vector<8x256xf32>
    tpu.vector_store %arg6[%c0_29, %c0_30], %80 {strides = array<i32>} : memref<128x256xf32, #tpu.memory_space<vmem>>, vector<8x256xf32>,
    %c0_31 = arith.constant 0 : index
    %c128_32 = arith.constant 128 : index
    %82 = vector.load %arg5[%c0_31, %c128_32] : memref<8x416xf32, #tpu.memory_space<vmem>>, vector<8x256xf32>
    %c8 = arith.constant 8 : index
    %c0_33 = arith.constant 0 : index
    %83 = vector.load %arg6[%c8, %c0_33] : memref<128x256xf32, #tpu.memory_space<vmem>>, vector<8x256xf32>
    tpu.vector_store %arg6[%c8, %c0_33], %82 {strides = array<i32>} : memref<128x256xf32, #tpu.memory_space<vmem>>, vector<8x256xf32>,
    %c0_34 = arith.constant 0 : index
    %c129 = arith.constant 129 : index
    %84 = vector.load %arg5[%c0_34, %c129] : memref<8x416xf32, #tpu.memory_space<vmem>>, vector<8x256xf32>
    %cst_35 = arith.constant 0.000000e+00 : f32
    %85 = vector.shape_cast %34 : vector<1x256xi1> to vector<1x256xi1>
    %86 = vector.broadcast %85 : vector<1x256xi1> to vector<8x256xi1>
    %87 = vector.broadcast %cst_35 : f32 to vector<8x256xf32>
    %88 = arith.select %86, %84, %87 : vector<8x256xi1>, vector<8x256xf32>
    %c16 = arith.constant 16 : index
    %c0_36 = arith.constant 0 : index
    %89 = vector.load %arg6[%c16, %c0_36] : memref<128x256xf32, #tpu.memory_space<vmem>>, vector<8x256xf32>
    tpu.vector_store %arg6[%c16, %c0_36], %88 {strides = array<i32>} : memref<128x256xf32, #tpu.memory_space<vmem>>, vector<8x256xf32>,
    %c0_37 = arith.constant 0 : index
    %c96 = arith.constant 96 : index
    %90 = vector.load %arg5[%c0_37, %c96] : memref<8x416xf32, #tpu.memory_space<vmem>>, vector<8x256xf32>
    %c24 = arith.constant 24 : index
    %c0_38 = arith.constant 0 : index
    %91 = vector.load %arg6[%c24, %c0_38] : memref<128x256xf32, #tpu.memory_space<vmem>>, vector<8x256xf32>
    tpu.vector_store %arg6[%c24, %c0_38], %90 {strides = array<i32>} : memref<128x256xf32, #tpu.memory_space<vmem>>, vector<8x256xf32>,
    %c0_39 = arith.constant 0 : index
    %c112 = arith.constant 112 : index
    %92 = vector.load %arg5[%c0_39, %c112] : memref<8x416xf32, #tpu.memory_space<vmem>>, vector<8x256xf32>
    %c32 = arith.constant 32 : index
    %c0_40 = arith.constant 0 : index
    %93 = vector.load %arg6[%c32, %c0_40] : memref<128x256xf32, #tpu.memory_space<vmem>>, vector<8x256xf32>
    tpu.vector_store %arg6[%c32, %c0_40], %92 {strides = array<i32>} : memref<128x256xf32, #tpu.memory_space<vmem>>, vector<8x256xf32>,
    %c0_41 = arith.constant 0 : index
    %c128_42 = arith.constant 128 : index
    %94 = vector.load %arg5[%c0_41, %c128_42] : memref<8x416xf32, #tpu.memory_space<vmem>>, vector<8x256xf32>
    %c40 = arith.constant 40 : index
    %c0_43 = arith.constant 0 : index
    %95 = vector.load %arg6[%c40, %c0_43] : memref<128x256xf32, #tpu.memory_space<vmem>>, vector<8x256xf32>
    tpu.vector_store %arg6[%c40, %c0_43], %94 {strides = array<i32>} : memref<128x256xf32, #tpu.memory_space<vmem>>, vector<8x256xf32>,
    %c0_44 = arith.constant 0 : index
    %c144 = arith.constant 144 : index
    %96 = vector.load %arg5[%c0_44, %c144] : memref<8x416xf32, #tpu.memory_space<vmem>>, vector<8x256xf32>
    %c48 = arith.constant 48 : index
    %c0_45 = arith.constant 0 : index
    %97 = vector.load %arg6[%c48, %c0_45] : memref<128x256xf32, #tpu.memory_space<vmem>>, vector<8x256xf32>
    tpu.vector_store %arg6[%c48, %c0_45], %96 {strides = array<i32>} : memref<128x256xf32, #tpu.memory_space<vmem>>, vector<8x256xf32>,
    %c0_46 = arith.constant 0 : index
    %c160 = arith.constant 160 : index
    %98 = vector.load %arg5[%c0_46, %c160] : memref<8x416xf32, #tpu.memory_space<vmem>>, vector<8x256xf32>
    %c56 = arith.constant 56 : index
    %c0_47 = arith.constant 0 : index
    %99 = vector.load %arg6[%c56, %c0_47] : memref<128x256xf32, #tpu.memory_space<vmem>>, vector<8x256xf32>
    tpu.vector_store %arg6[%c56, %c0_47], %98 {strides = array<i32>} : memref<128x256xf32, #tpu.memory_space<vmem>>, vector<8x256xf32>,
    %c0_48 = arith.constant 0 : index
    %c125 = arith.constant 125 : index
    %100 = vector.load %arg5[%c0_48, %c125] : memref<8x416xf32, #tpu.memory_space<vmem>>, vector<8x256xf32>
    %cst_49 = arith.constant 0.000000e+00 : f32
    %101 = vector.shape_cast %43 : vector<1x256xi1> to vector<1x256xi1>
    %102 = vector.broadcast %101 : vector<1x256xi1> to vector<8x256xi1>
    %103 = vector.broadcast %cst_49 : f32 to vector<8x256xf32>
    %104 = arith.select %102, %100, %103 : vector<8x256xi1>, vector<8x256xf32>
    %c64 = arith.constant 64 : index
    %c0_50 = arith.constant 0 : index
    %105 = vector.load %arg6[%c64, %c0_50] : memref<128x256xf32, #tpu.memory_space<vmem>>, vector<8x256xf32>
    tpu.vector_store %arg6[%c64, %c0_50], %104 {strides = array<i32>} : memref<128x256xf32, #tpu.memory_space<vmem>>, vector<8x256xf32>,
    %c0_51 = arith.constant 0 : index
    %c126 = arith.constant 126 : index
    %106 = vector.load %arg5[%c0_51, %c126] : memref<8x416xf32, #tpu.memory_space<vmem>>, vector<8x256xf32>
    %cst_52 = arith.constant 0.000000e+00 : f32
    %107 = vector.shape_cast %52 : vector<1x256xi1> to vector<1x256xi1>
    %108 = vector.broadcast %107 : vector<1x256xi1> to vector<8x256xi1>
    %109 = vector.broadcast %cst_52 : f32 to vector<8x256xf32>
    %110 = arith.select %108, %106, %109 : vector<8x256xi1>, vector<8x256xf32>
    %c72 = arith.constant 72 : index
    %c0_53 = arith.constant 0 : index
    %111 = vector.load %arg6[%c72, %c0_53] : memref<128x256xf32, #tpu.memory_space<vmem>>, vector<8x256xf32>
    tpu.vector_store %arg6[%c72, %c0_53], %110 {strides = array<i32>} : memref<128x256xf32, #tpu.memory_space<vmem>>, vector<8x256xf32>,
    %c0_54 = arith.constant 0 : index
    %c127_55 = arith.constant 127 : index
    %112 = vector.load %arg5[%c0_54, %c127_55] : memref<8x416xf32, #tpu.memory_space<vmem>>, vector<8x256xf32>
    %cst_56 = arith.constant 0.000000e+00 : f32
    %113 = vector.shape_cast %25 : vector<1x256xi1> to vector<1x256xi1>
    %114 = vector.broadcast %113 : vector<1x256xi1> to vector<8x256xi1>
    %115 = vector.broadcast %cst_56 : f32 to vector<8x256xf32>
    %116 = arith.select %114, %112, %115 : vector<8x256xi1>, vector<8x256xf32>
    %c80 = arith.constant 80 : index
    %c0_57 = arith.constant 0 : index
    %117 = vector.load %arg6[%c80, %c0_57] : memref<128x256xf32, #tpu.memory_space<vmem>>, vector<8x256xf32>
    tpu.vector_store %arg6[%c80, %c0_57], %116 {strides = array<i32>} : memref<128x256xf32, #tpu.memory_space<vmem>>, vector<8x256xf32>,
    %c0_58 = arith.constant 0 : index
    %c128_59 = arith.constant 128 : index
    %118 = vector.load %arg5[%c0_58, %c128_59] : memref<8x416xf32, #tpu.memory_space<vmem>>, vector<8x256xf32>
    %c88 = arith.constant 88 : index
    %c0_60 = arith.constant 0 : index
    %119 = vector.load %arg6[%c88, %c0_60] : memref<128x256xf32, #tpu.memory_space<vmem>>, vector<8x256xf32>
    tpu.vector_store %arg6[%c88, %c0_60], %118 {strides = array<i32>} : memref<128x256xf32, #tpu.memory_space<vmem>>, vector<8x256xf32>,
    %c0_61 = arith.constant 0 : index
    %c129_62 = arith.constant 129 : index
    %120 = vector.load %arg5[%c0_61, %c129_62] : memref<8x416xf32, #tpu.memory_space<vmem>>, vector<8x256xf32>
    %cst_63 = arith.constant 0.000000e+00 : f32
    %121 = vector.shape_cast %34 : vector<1x256xi1> to vector<1x256xi1>
    %122 = vector.broadcast %121 : vector<1x256xi1> to vector<8x256xi1>
    %123 = vector.broadcast %cst_63 : f32 to vector<8x256xf32>
    %124 = arith.select %122, %120, %123 : vector<8x256xi1>, vector<8x256xf32>
    %c96_64 = arith.constant 96 : index
    %c0_65 = arith.constant 0 : index
    %125 = vector.load %arg6[%c96_64, %c0_65] : memref<128x256xf32, #tpu.memory_space<vmem>>, vector<8x256xf32>
    tpu.vector_store %arg6[%c96_64, %c0_65], %124 {strides = array<i32>} : memref<128x256xf32, #tpu.memory_space<vmem>>, vector<8x256xf32>,
    %c0_66 = arith.constant 0 : index
    %c130 = arith.constant 130 : index
    %126 = vector.load %arg5[%c0_66, %c130] : memref<8x416xf32, #tpu.memory_space<vmem>>, vector<8x256xf32>
    %cst_67 = arith.constant 0.000000e+00 : f32
    %127 = vector.shape_cast %61 : vector<1x256xi1> to vector<1x256xi1>
    %128 = vector.broadcast %127 : vector<1x256xi1> to vector<8x256xi1>
    %129 = vector.broadcast %cst_67 : f32 to vector<8x256xf32>
    %130 = arith.select %128, %126, %129 : vector<8x256xi1>, vector<8x256xf32>
    %c104 = arith.constant 104 : index
    %c0_68 = arith.constant 0 : index
    %131 = vector.load %arg6[%c104, %c0_68] : memref<128x256xf32, #tpu.memory_space<vmem>>, vector<8x256xf32>
    tpu.vector_store %arg6[%c104, %c0_68], %130 {strides = array<i32>} : memref<128x256xf32, #tpu.memory_space<vmem>>, vector<8x256xf32>,
    %c0_69 = arith.constant 0 : index
    %c131 = arith.constant 131 : index
    %132 = vector.load %arg5[%c0_69, %c131] : memref<8x416xf32, #tpu.memory_space<vmem>>, vector<8x256xf32>
    %cst_70 = arith.constant 0.000000e+00 : f32
    %133 = vector.shape_cast %70 : vector<1x256xi1> to vector<1x256xi1>
    %134 = vector.broadcast %133 : vector<1x256xi1> to vector<8x256xi1>
    %135 = vector.broadcast %cst_70 : f32 to vector<8x256xf32>
    %136 = arith.select %134, %132, %135 : vector<8x256xi1>, vector<8x256xf32>
    %c112_71 = arith.constant 112 : index
    %c0_72 = arith.constant 0 : index
    %137 = vector.load %arg6[%c112_71, %c0_72] : memref<128x256xf32, #tpu.memory_space<vmem>>, vector<8x256xf32>
    tpu.vector_store %arg6[%c112_71, %c0_72], %136 {strides = array<i32>} : memref<128x256xf32, #tpu.memory_space<vmem>>, vector<8x256xf32>,
    %c0_73 = arith.constant 0 : index
    %c128_74 = arith.constant 128 : index
    %138 = vector.load %arg5[%c0_73, %c128_74] : memref<8x416xf32, #tpu.memory_space<vmem>>, vector<8x256xf32>
    %c120 = arith.constant 120 : index
    %c0_75 = arith.constant 0 : index
    %139 = vector.load %arg6[%c120, %c0_75] : memref<128x256xf32, #tpu.memory_space<vmem>>, vector<8x256xf32>
    tpu.vector_store %arg6[%c120, %c0_75], %138 {strides = array<i32>} : memref<128x256xf32, #tpu.memory_space<vmem>>, vector<8x256xf32>,
    %c0_76 = arith.constant 0 : index
    %c0_77 = arith.constant 0 : index
    %140 = vector.load %arg2[%c0_76, %c0_77] : memref<8x128xf32, #tpu.memory_space<vmem>>, vector<8x128xf32>
    %c0_78 = arith.constant 0 : index
    %c0_79 = arith.constant 0 : index
    %141 = vector.load %arg6[%c0_78, %c0_79] : memref<128x256xf32, #tpu.memory_space<vmem>>, vector<128x256xf32>
    %cst_80 = arith.constant dense<0.000000e+00> : vector<8x256xf32>
    %142 = tpu.matmul %140, %141, %cst_80 {dimension_numbers = #tpu.dot_dimension_numbers<[1], [0], [0], [1], [0, 0, 1, 1], [], []>} : vector<8x128xf32>, vector<128x256xf32>, vector<8x256xf32> -> vector<8x256xf32>
    %c0_81 = arith.constant 0 : index
    %c0_82 = arith.constant 0 : index
    %143 = vector.load %arg3[%c0_81, %c0_82] : memref<8x1xf32, #tpu.memory_space<vmem>>, vector<8x1xf32>
    %144 = vector.broadcast %143 : vector<8x1xf32> to vector<8x256xf32>
    %145 = arith.addf %142, %144 : vector<8x256xf32>
    %c0_83 = arith.constant 0 : index
    %c0_84 = arith.constant 0 : index
    %c0_85 = arith.constant 0 : index
    %146 = vector.load %arg4[%c0_83, %c0_84, %c0_85] : memref<1x8x256xf32, #tpu.memory_space<vmem>>, vector<1x8x256xf32>
    %147 = vector.shape_cast %146 : vector<1x8x256xf32> to vector<8x256xf32>
    %148 = vector.shape_cast %145 : vector<8x256xf32> to vector<1x8x256xf32>
    tpu.vector_store %arg4[%c0_83, %c0_84, %c0_85], %148 {strides = array<i32>} : memref<1x8x256xf32, #tpu.memory_space<vmem>>, vector<1x8x256xf32>,
    return
  }
  func.func @transform_0(%arg0: i32) -> (i32, i32, i32) {
    %c0_i32 = arith.constant 0 : i32
    %c0_i32_0 = arith.constant 0 : i32
    %c0_i32_1 = arith.constant 0 : i32
    return %arg0, %c0_i32, %c0_i32_0 : i32, i32, i32
  }
  func.func @transform_1(%arg0: i32) -> (i32, i32) {
    %c0_i32 = arith.constant 0 : i32
    %c0_i32_0 = arith.constant 0 : i32
    %c0_i32_1 = arith.constant 0 : i32
    return %c0_i32, %c0_i32_0 : i32, i32
  }
  func.func @transform_2(%arg0: i32) -> (i32, i32) {
    %c0_i32 = arith.constant 0 : i32
    %c0_i32_0 = arith.constant 0 : i32
    %c0_i32_1 = arith.constant 0 : i32
    return %c0_i32, %c0_i32_0 : i32, i32
  }
  func.func @transform_3(%arg0: i32) -> (i32, i32, i32) {
    %c0_i32 = arith.constant 0 : i32
    %c0_i32_0 = arith.constant 0 : i32
    %c0_i32_1 = arith.constant 0 : i32
    return %arg0, %c0_i32, %c0_i32_0 : i32, i32, i32
  }
}

</mosaic_0001>

<llo_original>
// kernel: tpu_custom_call.1
$region0: #{tpu_custom_call.1}
  #allocation0 [shape = 'u32[]', space=smem, size = 0x4, offset = 0x4, fixed_abs, tag = 'smem constant byte address 0x4 - core index']
  #allocation1 [shape = 'u32[144,128]{1,0:T(1,128)}', space=vmem, size = 0x12000, scoped, tag = 'internal scratch']
  #allocation2 [shape = 'f32[8,416]{1,0:T(8,128)}', space=vmem, size = 0x4000, scoped, tag = 'scratch operand']
  #allocation3 [shape = 'f32[128,256]{1,0:T(8,128)}', space=vmem, size = 0x20000, scoped, tag = 'scratch operand']
  %s0 = inlined_call_operand.hbm [shape: f32[2,4,256], index: 0, kind: input, shape index: {}]
  %s1 = inlined_call_operand.vmem [shape: f32[8,128], index: 1, kind: input, shape index: {}]
  %s2 = inlined_call_operand.vmem [shape: f32[8,1], index: 2, kind: input, shape index: {}]
  %s3 = inlined_call_operand.hbm [shape: f32[2,8,256], index: 3, kind: output, shape index: {}]
  %s4 = sld [smem:[#allocation0]]
  $region49: #{tpu_custom_call.1} parent=0
    _
  %s6 = ssub.s32 1, %s4
  %s7 = scalar_select 0, %s6, %s4
  $region1: #{tpu_custom_call.1} parent=0
    #allocation4 [shape = 'u8[8192]{0}', space=vmem, size = 0x2000, scoped, tag = 'input window, operand 0']
    #allocation5 [shape = 's32[2]{0}', space=sflag, size = 0x8, scoped, tag = 'scoped memory for tpu_custom_call.1']
    #allocation6 [shape = 's32[2]{0}', space=sflag, size = 0x8, scoped, tag = 'scoped memory for tpu_custom_call.1']
    #allocation7 [shape = 'u8[16384]{0}', space=vmem, size = 0x4000, scoped, tag = 'output window, operand 0']
    %8 = vsyncpa [#allocation5], 0
    %s9 = scalar_lea.sflag [#allocation5], 1
    %10 = vsyncpa %s9, 0
    %11 = vsyncpa [#allocation6], 0
    %s12 = scalar_lea.sflag [#allocation6], 1
    %13 = vsyncpa %s12, 0
    loop: start=0, step=1, limit=4
    $region2: #{tpu_custom_call.1} parent=1 // loop_pre_header
      _
    $region3: #{tpu_custom_call.1} parent=1 // loop_header
      %s15 = sphi 0, %s19
      %p16 = scmp.ge.s32.totalorder %s15, 4
      %s25 = sphi 0, %s27
      %s28 = sphi 0, %s25
      %s29 = sphi 0, %s28
      %s45 = sphi 0, %s29
      %s49 = sphi 0, %s49
      %s51 = sphi 0, %s49
      %s52 = sphi 0, %s51
      %s66 = sphi 0, %s52
      %s70 = sphi 0, %s70
      %s72 = sphi 0, %s70
      %s73 = sphi 0, %s72
      %s87 = sphi 0, %s73
      %s93 = sphi 0, %s95
      %s96 = sphi 0, %s93
      %s97 = sphi 0, %s96
      %s113 = sphi 0, %s97
    $region4: #{tpu_custom_call.1} parent=1 // loop_header_branch
      %18 = sbr.rel (%p16) target = $region8
    $region5: #{tpu_custom_call.1} parent=1 // loop_body
      %s20 = ssub.s32 %s15, 1
      %s21 = ssub.s32 %s15, 2
      %s22 = sadd.s32 %s15, 1
      %s23 = ssub.s32 %s15, %s22
      %p24 = scmp.eq.s32.totalorder %s23, 0
      %s26 = sadd.s32 %s25, 1
      %s27 = scalar_select %p24, %s25, %s26
      %p30 = pneg %p24
      %p31 = scmp.eq.s32.totalorder %s15, 1
      %p32 = por %p30, %p31
      %p33 = scmp.ne.s32.totalorder %s25, %s28
      %p34 = scmp.eq.s32.totalorder %s15, 0
      %p35 = por %p33, %p34
      %p36 = scmp.ne.s32.totalorder %s25, %s28
      %p37 = scmp.eq.s32.totalorder %s20, 1
      %p38 = por %p36, %p37
      %p39 = scmp.ne.s32.totalorder %s28, %s29
      %p40 = scmp.eq.s32.totalorder %s20, 0
      %p41 = por %p39, %p40
      %p42 = scmp.ne.s32.totalorder %s28, %s29
      %p43 = scmp.eq.s32.totalorder %s21, 1
      %p44 = por %p42, %p43
      %p46 = scmp.ne.s32.totalorder %s29, %s45
      %p47 = scmp.eq.s32.totalorder %s21, 0
      %p48 = por %p46, %p47
      %s50 = sadd.s32 %s49, 1
      %p53 = scmp.eq.s32.totalorder %s15, 1
      %p54 = scmp.ne.s32.totalorder %s49, %s51
      %p55 = scmp.eq.s32.totalorder %s15, 0
      %p56 = por %p54, %p55
      %p57 = scmp.ne.s32.totalorder %s49, %s51
      %p58 = scmp.eq.s32.totalorder %s20, 1
      %p59 = por %p57, %p58
      %p60 = scmp.ne.s32.totalorder %s51, %s52
      %p61 = scmp.eq.s32.totalorder %s20, 0
      %p62 = por %p60, %p61
      %p63 = scmp.ne.s32.totalorder %s51, %s52
      %p64 = scmp.eq.s32.totalorder %s21, 1
      %p65 = por %p63, %p64
      %p67 = scmp.ne.s32.totalorder %s52, %s66
      %p68 = scmp.eq.s32.totalorder %s21, 0
      %p69 = por %p67, %p68
      %s71 = sadd.s32 %s70, 1
      %p74 = scmp.eq.s32.totalorder %s15, 1
      %p75 = scmp.ne.s32.totalorder %s70, %s72
      %p76 = scmp.eq.s32.totalorder %s15, 0
      %p77 = por %p75, %p76
      %p78 = scmp.ne.s32.totalorder %s70, %s72
      %p79 = scmp.eq.s32.totalorder %s20, 1
      %p80 = por %p78, %p79
      %p81 = scmp.ne.s32.totalorder %s72, %s73
      %p82 = scmp.eq.s32.totalorder %s20, 0
      %p83 = por %p81, %p82
      %p84 = scmp.ne.s32.totalorder %s72, %s73
      %p85 = scmp.eq.s32.totalorder %s21, 1
      %p86 = por %p84, %p85
      %p88 = scmp.ne.s32.totalorder %s73, %s87
      %p89 = scmp.eq.s32.totalorder %s21, 0
      %p90 = por %p88, %p89
      %s91 = ssub.s32 %s15, %s22
      %p92 = scmp.eq.s32.totalorder %s91, 0
      %s94 = sadd.s32 %s93, 1
      %s95 = scalar_select %p92, %s93, %s94
      %p98 = pneg %p92
      %p99 = scmp.eq.s32.totalorder %s15, 1
      %p100 = por %p98, %p99
      %p101 = scmp.ne.s32.totalorder %s93, %s96
      %p102 = scmp.eq.s32.totalorder %s15, 0
      %p103 = por %p101, %p102
      %p104 = scmp.ne.s32.totalorder %s93, %s96
      %p105 = scmp.eq.s32.totalorder %s20, 1
      %p106 = por %p104, %p105
      %p107 = scmp.ne.s32.totalorder %s96, %s97
      %p108 = scmp.eq.s32.totalorder %s20, 0
      %p109 = por %p107, %p108
      %p110 = scmp.ne.s32.totalorder %s96, %s97
      %p111 = scmp.eq.s32.totalorder %s21, 1
      %p112 = por %p110, %p111
      %p114 = scmp.ne.s32.totalorder %s97, %s113
      %p115 = scmp.eq.s32.totalorder %s21, 0
      %p116 = por %p114, %p115
      %p117 = scmp.le.s32.totalorder 1, %s15
      %p118 = scmp.lt.s32.totalorder %s15, 3
      %p119 = pnand %p117, %p118
      %p120 = pneg %p119
      // Predicated region
      $region9: #{tpu_custom_call.1} parent=5 // pred_check
        _
      $region10: #{tpu_custom_call.1} parent=5 // pred_check_branch
        %122 = sbr.rel (%p119) target = $region12
      $region11: #{tpu_custom_call.1} parent=5 // pred_region
        %s123 = ssub.s32 %s15, 1
        // Predicated region
        $region13: #{tpu_custom_call.1} parent=11 // pred_check
          %p124 = pneg %p62
        $region14: #{tpu_custom_call.1} parent=11 // pred_check_branch
          %126 = sbr.rel (%p124) target = $region16
        $region15: #{tpu_custom_call.1} parent=11 // pred_region
          _
        $region16: #{tpu_custom_call.1} parent=11 // pred_fallthru
          _
        // Predicated region
        $region17: #{tpu_custom_call.1} parent=11 // pred_check
          %p127 = pneg %p83
        $region18: #{tpu_custom_call.1} parent=11 // pred_check_branch
          %129 = sbr.rel (%p127) target = $region20
        $region19: #{tpu_custom_call.1} parent=11 // pred_region
          _
        $region20: #{tpu_custom_call.1} parent=11 // pred_fallthru
          _
      $region12: #{tpu_custom_call.1} parent=5 // pred_fallthru
        _
      %p130 = scmp.lt.s32.totalorder %s15, 2
      // Predicated region
      $region21: #{tpu_custom_call.1} parent=5 // pred_check
        %p131 = pneg %p130
      $region22: #{tpu_custom_call.1} parent=5 // pred_check_branch
        %133 = sbr.rel (%p131) target = $region24
      $region23: #{tpu_custom_call.1} parent=5 // pred_region
        // Predicated region
        $region25: #{tpu_custom_call.1} parent=23 // pred_check
          %p134 = pneg %p35
        $region26: #{tpu_custom_call.1} parent=23 // pred_check_branch
          %136 = sbr.rel (%p134) target = $region28
        $region27: #{tpu_custom_call.1} parent=23 // pred_region
          %s137 = sand.u32 %s25, 1
          %s138 = scalar_lea.sflag [#allocation5], %s137
          %s139 = sand.u32 %s25, 1
          %s140 = smul.addr %s139, 8
          %s141 = scalar_lea.vmem [#allocation4], %s140
          %s143 = ssub.s32 128, 128
          %144 = vsyncadd %s138, %s143
          %s145 = smul.addr %s15, 2
          %s146 = smul.addr %s145, 64
          %s147 = scalar_lea.hbm %s0, %s146
          %s149 = sshll.u32 %s141, 4
          %s150 = int_to_ptr.vmem [resolvable:$true] %s149
          %152 = dma.hbm_to_vmem [thread:$0]  %s147, 128, %s150, %s138
        $region28: #{tpu_custom_call.1} parent=23 // pred_fallthru
          _
      $region24: #{tpu_custom_call.1} parent=5 // pred_fallthru
        _
      %p153 = scmp.le.s32.totalorder 1, %s15
      %p154 = scmp.lt.s32.totalorder %s15, 3
      %p155 = pnand %p153, %p154
      %p156 = pneg %p155
      // Predicated region
      $region29: #{tpu_custom_call.1} parent=5 // pred_check
        _
      $region30: #{tpu_custom_call.1} parent=5 // pred_check_branch
        %158 = sbr.rel (%p155) target = $region32
      $region31: #{tpu_custom_call.1} parent=5 // pred_region
        %s159 = ssub.s32 %s15, 1
        %s160 = sand.u32 %s28, 1
        %s161 = scalar_lea.sflag [#allocation5], %s160
        %s162 = sand.u32 %s28, 1
        %s163 = smul.addr %s162, 8
        %s164 = scalar_lea.vmem [#allocation4], %s163
        // Predicated region
        $region33: #{tpu_custom_call.1} parent=31 // pred_check
          %p165 = pneg %p41
        $region34: #{tpu_custom_call.1} parent=31 // pred_check_branch
          %167 = sbr.rel (%p165) target = $region36
        $region35: #{tpu_custom_call.1} parent=31 // pred_region
          %168 = dma.done %s161, 128
        $region36: #{tpu_custom_call.1} parent=31 // pred_fallthru
          _
        %s169 = sand.u32 %s28, 1
        %s170 = scalar_lea.sflag [#allocation5], %s169
        %s171 = sand.u32 %s28, 1
        %s172 = smul.addr %s171, 8
        %s173 = scalar_lea.vmem [#allocation4], %s172
        %p174 = pneg %p41
        %p175 = pneg %p38
        %p176 = pneg %p62
        %p177 = pneg %p59
        %p178 = pneg %p83
        %p179 = pneg %p80
        %p180 = pneg %p109
        %p181 = pneg %p106
        %s182 = sand.u32 %s96, 1
        %s183 = scalar_lea.sflag [#allocation6], %s182
        %s184 = sand.u32 %s96, 1
        %s185 = smul.addr %s184, 16
        %s186 = scalar_lea.vmem [#allocation7], %s185
        %v187 = vlaneseq
        %v188 = vand.u32 %v187, 127
        %v189 = vadd.s32 %v188, 128
        %vm190 = vcmp.lt.s32.totalorder %v188, 0
        %v191 = vsub.s32 0, %v188
        %v192 = vsel %vm190, %v191, %v188
        %v193 = vshrl.u32 %v192, 4
        %v194 = vand.u32 %v192, 15
        %v195 = vsub.s32 0, %v194
        %v196 = vsel %vm190, %v195, %v194
        %vm197 = vcmp.lt.s32.totalorder %v189, 0
        %v198 = vsub.s32 0, %v189
        %v199 = vsel %vm197, %v198, %v189
        %v200 = vshrl.u32 %v199, 4
        %v201 = vand.u32 %v199, 15
        %v202 = vsub.s32 0, %v201
        %v203 = vsel %vm197, %v202, %v201
        %vm204 = vcmp.ne.s32.totalorder %v196, 0
        %vm205 = vcmp.ne.s32.totalorder %v203, 0
        %vm206 = vcmp.lt.s32.totalorder %v196, 0
        %vm207 = vcmp.lt.s32.totalorder %v203, 0
        %vm208 = vmand %vm206, %vm204
        %vm209 = vmand %vm207, %vm205
        %v210 = vadd.s32 %v196, 16
        %v211 = vadd.s32 %v203, 16
        %v212 = vsel %vm208, %v210, %v196
        %v213 = vsel %vm209, %v211, %v203
        %v214 = vadd.s32 %v212, 4294967295
        %v215 = vadd.s32 %v213, 4294967295
        %vm216 = vcmp.ge.s32.totalorder %v214, 0
        %vm217 = vcmp.ge.s32.totalorder %v215, 0
        %vm218 = vcmp.lt.s32.totalorder %v214, 16
        %vm219 = vcmp.lt.s32.totalorder %v215, 16
        %vm220 = vmand %vm216, %vm218
        %vm221 = vmand %vm217, %vm219
        %v222 = vadd.s32 %v212, 1
        %v223 = vadd.s32 %v213, 1
        %vm224 = vcmp.ge.s32.totalorder %v222, 0
        %vm225 = vcmp.ge.s32.totalorder %v223, 0
        %vm226 = vcmp.lt.s32.totalorder %v222, 16
        %vm227 = vcmp.lt.s32.totalorder %v223, 16
        %vm228 = vmand %vm224, %vm226
        %vm229 = vmand %vm225, %vm227
        %v230 = vadd.s32 %v212, 4294967293
        %v231 = vadd.s32 %v213, 4294967293
        %vm232 = vcmp.ge.s32.totalorder %v230, 0
        %vm233 = vcmp.ge.s32.totalorder %v231, 0
        %vm234 = vcmp.lt.s32.totalorder %v230, 16
        %vm235 = vcmp.lt.s32.totalorder %v231, 16
        %vm236 = vmand %vm232, %vm234
        %vm237 = vmand %vm233, %vm235
        %v238 = vadd.s32 %v212, 4294967294
        %v239 = vadd.s32 %v213, 4294967294
        %vm240 = vcmp.ge.s32.totalorder %v238, 0
        %vm241 = vcmp.ge.s32.totalorder %v239, 0
        %vm242 = vcmp.lt.s32.totalorder %v238, 16
        %vm243 = vcmp.lt.s32.totalorder %v239, 16
        %vm244 = vmand %vm240, %vm242
        %vm245 = vmand %vm241, %vm243
        %v246 = vadd.s32 %v212, 2
        %v247 = vadd.s32 %v213, 2
        %vm248 = vcmp.ge.s32.totalorder %v246, 0
        %vm249 = vcmp.ge.s32.totalorder %v247, 0
        %vm250 = vcmp.lt.s32.totalorder %v246, 16
        %vm251 = vcmp.lt.s32.totalorder %v247, 16
        %vm252 = vmand %vm248, %vm250
        %vm253 = vmand %vm249, %vm251
        %v254 = vadd.s32 %v212, 3
        %v255 = vadd.s32 %v213, 3
        %vm256 = vcmp.ge.s32.totalorder %v254, 0
        %vm257 = vcmp.ge.s32.totalorder %v255, 0
        %vm258 = vcmp.lt.s32.totalorder %v254, 16
        %vm259 = vcmp.lt.s32.totalorder %v255, 16
        %vm260 = vmand %vm256, %vm258
        %vm261 = vmand %vm257, %vm259
        %262 = vst [vmem:[#allocation2] sm:$0xff] 0.0
        %263 = vst [vmem:[#allocation2 + $0x8] sm:$0xff] 0.0
        %264 = vst [vmem:[#allocation2 + $0x10] sm:$0xff] 0.0
        %vm265 = vcmask 261120
        %266 = vst.msk [vmem:[#allocation2 + $0x18] sm:$0xff] %vm265, 0.0
        %v267 = vld [vmem:[%s164] sm:$0xff]
        %v269 = vcombine.high %v267, %v267
        %271 = vst [vmem:[#allocation2 + $0x8] sm:$0xf] %v267
        %272 = vst [vmem:[#allocation2 + $0x10] sm:$0xf] %v269
        %v273 = vld [vmem:[#allocation2] sm:$0xff]
        %v274 = vld [vmem:[#allocation2 + $0x8] sm:$0xff]
        %v275 = vld [vmem:[#allocation2 + $0x10] sm:$0xff]
        %v276 = vsel %vm220, 1, 0
        %v277 = vsel %vm221, 1, 0
        %vm278 = vcmp.eq.s32.totalorder %v276, 1
        %vm279 = vcmp.eq.s32.totalorder %v277, 1
        %283 = vrot.lane.b32.xlu0 %v273, 1
        %v284 = vpop.permute.xlu0 %283
        %285 = vrot.lane.b32.xlu0 %v274, 1
        %v286 = vpop.permute.xlu0 %285
        %287 = vrot.lane.b32.xlu0 %v275, 1
        %v288 = vpop.permute.xlu0 %287
        %vm289 = vcmask 7168
        %v290 = vsel %vm289, %v284, %v286
        %v291 = vsel %vm289, %v286, %v288
        %v294 = vsel %vm278, %v290, 0.0
        %v295 = vsel %vm279, %v291, 0.0
        %296 = vst [vmem:[#allocation3] sm:$0xff] %v294
        %297 = vst [vmem:[#allocation3 + $0x8] sm:$0xff] %v295
        %v298 = vld [vmem:[#allocation2 + $0x8] sm:$0xff]
        %v299 = vld [vmem:[#allocation2 + $0x10] sm:$0xff]
        %300 = vst [vmem:[#allocation3 + $0x10] sm:$0xff] %v298
        %301 = vst [vmem:[#allocation3 + $0x18] sm:$0xff] %v299
        %v302 = vld [vmem:[#allocation2 + $0x8] sm:$0xff]
        %v303 = vld [vmem:[#allocation2 + $0x10] sm:$0xff]
        %v304 = vld [vmem:[#allocation2 + $0x18] sm:$0xff]
        %v305 = vsel %vm228, 1, 0
        %v306 = vsel %vm229, 1, 0
        %vm307 = vcmp.eq.s32.totalorder %v305, 1
        %vm308 = vcmp.eq.s32.totalorder %v306, 1
        %312 = vrot.lane.b32.xlu0 %v302, 127
        %v313 = vpop.permute.xlu0 %312
        %314 = vrot.lane.b32.xlu0 %v303, 127
        %v315 = vpop.permute.xlu0 %314
        %316 = vrot.lane.b32.xlu0 %v304, 127
        %v317 = vpop.permute.xlu0 %316
        %vm318 = vcmask 1039360
        %v319 = vsel %vm318, %v313, %v315
        %v320 = vsel %vm318, %v315, %v317
        %v323 = vsel %vm307, %v319, 0.0
        %v324 = vsel %vm308, %v320, 0.0
        %325 = vst [vmem:[#allocation3 + $0x20] sm:$0xff] %v323
        %326 = vst [vmem:[#allocation3 + $0x28] sm:$0xff] %v324
        %v327 = vld [vmem:[#allocation2] sm:$0xff]
        %v328 = vld [vmem:[#allocation2 + $0x8] sm:$0xff]
        %v329 = vld [vmem:[#allocation2 + $0x10] sm:$0xff]
        %333 = vrot.lane.b32.xlu0 %v327, 32
        %v334 = vpop.permute.xlu0 %333
        %335 = vrot.lane.b32.xlu0 %v328, 32
        %v336 = vpop.permute.xlu0 %335
        %337 = vrot.lane.b32.xlu0 %v329, 32
        %v338 = vpop.permute.xlu0 %337
        %v339 = vsel %vm265, %v334, %v336
        %v340 = vsel %vm265, %v336, %v338
        %343 = vst [vmem:[#allocation3 + $0x30] sm:$0xff] %v339
        %344 = vst [vmem:[#allocation3 + $0x38] sm:$0xff] %v340
        %v345 = vld [vmem:[#allocation2] sm:$0xff]
        %v346 = vld [vmem:[#allocation2 + $0x8] sm:$0xff]
        %v347 = vld [vmem:[#allocation2 + $0x10] sm:$0xff]
        %351 = vrot.lane.b32.xlu0 %v345, 16
        %v352 = vpop.permute.xlu0 %351
        %353 = vrot.lane.b32.xlu0 %v346, 16
        %v354 = vpop.permute.xlu0 %353
        %355 = vrot.lane.b32.xlu0 %v347, 16
        %v356 = vpop.permute.xlu0 %355
        %vm357 = vcmask 130048
        %v358 = vsel %vm357, %v352, %v354
        %v359 = vsel %vm357, %v354, %v356
        %362 = vst [vmem:[#allocation3 + $0x40] sm:$0xff] %v358
        %363 = vst [vmem:[#allocation3 + $0x48] sm:$0xff] %v359
        %v364 = vld [vmem:[#allocation2 + $0x8] sm:$0xff]
        %v365 = vld [vmem:[#allocation2 + $0x10] sm:$0xff]
        %366 = vst [vmem:[#allocation3 + $0x50] sm:$0xff] %v364
        %367 = vst [vmem:[#allocation3 + $0x58] sm:$0xff] %v365
        %v368 = vld [vmem:[#allocation2 + $0x8] sm:$0xff]
        %v369 = vld [vmem:[#allocation2 + $0x10] sm:$0xff]
        %v370 = vld [vmem:[#allocation2 + $0x18] sm:$0xff]
        %374 = vrot.lane.b32.xlu0 %v368, 112
        %v375 = vpop.permute.xlu0 %374
        %376 = vrot.lane.b32.xlu0 %v369, 112
        %v377 = vpop.permute.xlu0 %376
        %378 = vrot.lane.b32.xlu0 %v370, 112
        %v379 = vpop.permute.xlu0 %378
        %vm380 = vcmask 916480
        %v381 = vsel %vm380, %v375, %v377
        %v382 = vsel %vm380, %v377, %v379
        %385 = vst [vmem:[#allocation3 + $0x60] sm:$0xff] %v381
        %386 = vst [vmem:[#allocation3 + $0x68] sm:$0xff] %v382
        %v387 = vld [vmem:[#allocation2 + $0x8] sm:$0xff]
        %v388 = vld [vmem:[#allocation2 + $0x10] sm:$0xff]
        %v389 = vld [vmem:[#allocation2 + $0x18] sm:$0xff]
        %393 = vrot.lane.b32.xlu0 %v387, 96
        %v394 = vpop.permute.xlu0 %393
        %395 = vrot.lane.b32.xlu0 %v388, 96
        %v396 = vpop.permute.xlu0 %395
        %397 = vrot.lane.b32.xlu0 %v389, 96
        %v398 = vpop.permute.xlu0 %397
        %vm399 = vcmask 785408
        %v400 = vsel %vm399, %v394, %v396
        %v401 = vsel %vm399, %v396, %v398
        %404 = vst [vmem:[#allocation3 + $0x70] sm:$0xff] %v400
        %405 = vst [vmem:[#allocation3 + $0x78] sm:$0xff] %v401
        %v406 = vld [vmem:[#allocation2] sm:$0xff]
        %v407 = vld [vmem:[#allocation2 + $0x8] sm:$0xff]
        %v408 = vld [vmem:[#allocation2 + $0x10] sm:$0xff]
        %v409 = vsel %vm236, 1, 0
        %v410 = vsel %vm237, 1, 0
        %vm411 = vcmp.eq.s32.totalorder %v409, 1
        %vm412 = vcmp.eq.s32.totalorder %v410, 1
        %416 = vrot.lane.b32.xlu0 %v406, 3
        %v417 = vpop.permute.xlu0 %416
        %418 = vrot.lane.b32.xlu0 %v407, 3
        %v419 = vpop.permute.xlu0 %418
        %420 = vrot.lane.b32.xlu0 %v408, 3
        %v421 = vpop.permute.xlu0 %420
        %vm422 = vcmask 23552
        %v423 = vsel %vm422, %v417, %v419
        %v424 = vsel %vm422, %v419, %v421
        %v427 = vsel %vm411, %v423, 0.0
        %v428 = vsel %vm412, %v424, 0.0
        %429 = vst [vmem:[#allocation3 + $0x80] sm:$0xff] %v427
        %430 = vst [vmem:[#allocation3 + $0x88] sm:$0xff] %v428
        %v431 = vld [vmem:[#allocation2] sm:$0xff]
        %v432 = vld [vmem:[#allocation2 + $0x8] sm:$0xff]
        %v433 = vld [vmem:[#allocation2 + $0x10] sm:$0xff]
        %v434 = vsel %vm244, 1, 0
        %v435 = vsel %vm245, 1, 0
        %vm436 = vcmp.eq.s32.totalorder %v434, 1
        %vm437 = vcmp.eq.s32.totalorder %v435, 1
        %441 = vrot.lane.b32.xlu0 %v431, 2
        %v442 = vpop.permute.xlu0 %441
        %443 = vrot.lane.b32.xlu0 %v432, 2
        %v444 = vpop.permute.xlu0 %443
        %445 = vrot.lane.b32.xlu0 %v433, 2
        %v446 = vpop.permute.xlu0 %445
        %vm447 = vcmask 15360
        %v448 = vsel %vm447, %v442, %v444
        %v449 = vsel %vm447, %v444, %v446
        %v452 = vsel %vm436, %v448, 0.0
        %v453 = vsel %vm437, %v449, 0.0
        %454 = vst [vmem:[#allocation3 + $0x90] sm:$0xff] %v452
        %455 = vst [vmem:[#allocation3 + $0x98] sm:$0xff] %v453
        %v456 = vld [vmem:[#allocation2] sm:$0xff]
        %v457 = vld [vmem:[#allocation2 + $0x8] sm:$0xff]
        %v458 = vld [vmem:[#allocation2 + $0x10] sm:$0xff]
        %462 = vrot.lane.b32.xlu0 %v456, 1
        %v463 = vpop.permute.xlu0 %462
        %464 = vrot.lane.b32.xlu0 %v457, 1
        %v465 = vpop.permute.xlu0 %464
        %466 = vrot.lane.b32.xlu0 %v458, 1
        %v467 = vpop.permute.xlu0 %466
        %v468 = vsel %vm289, %v463, %v465
        %v469 = vsel %vm289, %v465, %v467
        %v472 = vsel %vm278, %v468, 0.0
        %v473 = vsel %vm279, %v469, 0.0
        %474 = vst [vmem:[#allocation3 + $0xa0] sm:$0xff] %v472
        %475 = vst [vmem:[#allocation3 + $0xa8] sm:$0xff] %v473
        %v476 = vld [vmem:[#allocation2 + $0x8] sm:$0xff]
        %v477 = vld [vmem:[#allocation2 + $0x10] sm:$0xff]
        %478 = vst [vmem:[#allocation3 + $0xb0] sm:$0xff] %v476
        %479 = vst [vmem:[#allocation3 + $0xb8] sm:$0xff] %v477
        %v480 = vld [vmem:[#allocation2 + $0x8] sm:$0xff]
        %v481 = vld [vmem:[#allocation2 + $0x10] sm:$0xff]
        %v482 = vld [vmem:[#allocation2 + $0x18] sm:$0xff]
        %486 = vrot.lane.b32.xlu0 %v480, 127
        %v487 = vpop.permute.xlu0 %486
        %488 = vrot.lane.b32.xlu0 %v481, 127
        %v489 = vpop.permute.xlu0 %488
        %490 = vrot.lane.b32.xlu0 %v482, 127
        %v491 = vpop.permute.xlu0 %490
        %v492 = vsel %vm318, %v487, %v489
        %v493 = vsel %vm318, %v489, %v491
        %v496 = vsel %vm307, %v492, 0.0
        %v497 = vsel %vm308, %v493, 0.0
        %498 = vst [vmem:[#allocation3 + $0xc0] sm:$0xff] %v496
        %499 = vst [vmem:[#allocation3 + $0xc8] sm:$0xff] %v497
        %v500 = vld [vmem:[#allocation2 + $0x8] sm:$0xff]
        %v501 = vld [vmem:[#allocation2 + $0x10] sm:$0xff]
        %v502 = vld [vmem:[#allocation2 + $0x18] sm:$0xff]
        %v503 = vsel %vm252, 1, 0
        %v504 = vsel %vm253, 1, 0
        %vm505 = vcmp.eq.s32.totalorder %v503, 1
        %vm506 = vcmp.eq.s32.totalorder %v504, 1
        %510 = vrot.lane.b32.xlu0 %v500, 126
        %v511 = vpop.permute.xlu0 %510
        %512 = vrot.lane.b32.xlu0 %v501, 126
        %v513 = vpop.permute.xlu0 %512
        %514 = vrot.lane.b32.xlu0 %v502, 126
        %v515 = vpop.permute.xlu0 %514
        %vm516 = vcmask 1031168
        %v517 = vsel %vm516, %v511, %v513
        %v518 = vsel %vm516, %v513, %v515
        %v521 = vsel %vm505, %v517, 0.0
        %v522 = vsel %vm506, %v518, 0.0
        %523 = vst [vmem:[#allocation3 + $0xd0] sm:$0xff] %v521
        %524 = vst [vmem:[#allocation3 + $0xd8] sm:$0xff] %v522
        %v525 = vld [vmem:[#allocation2 + $0x8] sm:$0xff]
        %v526 = vld [vmem:[#allocation2 + $0x10] sm:$0xff]
        %v527 = vld [vmem:[#allocation2 + $0x18] sm:$0xff]
        %v528 = vsel %vm260, 1, 0
        %v529 = vsel %vm261, 1, 0
        %vm530 = vcmp.eq.s32.totalorder %v528, 1
        %vm531 = vcmp.eq.s32.totalorder %v529, 1
        %535 = vrot.lane.b32.xlu0 %v525, 125
        %v536 = vpop.permute.xlu0 %535
        %537 = vrot.lane.b32.xlu0 %v526, 125
        %v538 = vpop.permute.xlu0 %537
        %539 = vrot.lane.b32.xlu0 %v527, 125
        %v540 = vpop.permute.xlu0 %539
        %vm541 = vcmask 1022976
        %v542 = vsel %vm541, %v536, %v538
        %v543 = vsel %vm541, %v538, %v540
        %v546 = vsel %vm530, %v542, 0.0
        %v547 = vsel %vm531, %v543, 0.0
        %548 = vst [vmem:[#allocation3 + $0xe0] sm:$0xff] %v546
        %549 = vst [vmem:[#allocation3 + $0xe8] sm:$0xff] %v547
        %v550 = vld [vmem:[#allocation2 + $0x8] sm:$0xff]
        %v551 = vld [vmem:[#allocation2 + $0x10] sm:$0xff]
        %552 = vst [vmem:[#allocation3 + $0xf0] sm:$0xff] %v550
        %553 = vst [vmem:[#allocation3 + $0xf8] sm:$0xff] %v551
        %v554 = vld [vmem:[%s1] sm:$0xff]
        %v555 = vld [vmem:[#allocation3] sm:$0xff]
        %v556 = vld [vmem:[#allocation3 + $0x8] sm:$0xff]
        %v557 = vld [vmem:[#allocation3 + $0x10] sm:$0xff]
        %v558 = vld [vmem:[#allocation3 + $0x18] sm:$0xff]
        %v559 = vld [vmem:[#allocation3 + $0x20] sm:$0xff]
        %v560 = vld [vmem:[#allocation3 + $0x28] sm:$0xff]
        %v561 = vld [vmem:[#allocation3 + $0x30] sm:$0xff]
        %v562 = vld [vmem:[#allocation3 + $0x38] sm:$0xff]
        %v563 = vld [vmem:[#allocation3 + $0x40] sm:$0xff]
        %v564 = vld [vmem:[#allocation3 + $0x48] sm:$0xff]
        %v565 = vld [vmem:[#allocation3 + $0x50] sm:$0xff]
        %v566 = vld [vmem:[#allocation3 + $0x58] sm:$0xff]
        %v567 = vld [vmem:[#allocation3 + $0x60] sm:$0xff]
        %v568 = vld [vmem:[#allocation3 + $0x68] sm:$0xff]
        %v569 = vld [vmem:[#allocation3 + $0x70] sm:$0xff]
        %v570 = vld [vmem:[#allocation3 + $0x78] sm:$0xff]
        %v571 = vld [vmem:[#allocation3 + $0x80] sm:$0xff]
        %v572 = vld [vmem:[#allocation3 + $0x88] sm:$0xff]
        %v573 = vld [vmem:[#allocation3 + $0x90] sm:$0xff]
        %v574 = vld [vmem:[#allocation3 + $0x98] sm:$0xff]
        %v575 = vld [vmem:[#allocation3 + $0xa0] sm:$0xff]
        %v576 = vld [vmem:[#allocation3 + $0xa8] sm:$0xff]
        %v577 = vld [vmem:[#allocation3 + $0xb0] sm:$0xff]
        %v578 = vld [vmem:[#allocation3 + $0xb8] sm:$0xff]
        %v579 = vld [vmem:[#allocation3 + $0xc0] sm:$0xff]
        %v580 = vld [vmem:[#allocation3 + $0xc8] sm:$0xff]
        %v581 = vld [vmem:[#allocation3 + $0xd0] sm:$0xff]
        %v582 = vld [vmem:[#allocation3 + $0xd8] sm:$0xff]
        %v583 = vld [vmem:[#allocation3 + $0xe0] sm:$0xff]
        %v584 = vld [vmem:[#allocation3 + $0xe8] sm:$0xff]
        %v585 = vld [vmem:[#allocation3 + $0xf0] sm:$0xff]
        %v586 = vld [vmem:[#allocation3 + $0xf8] sm:$0xff]
        %v587 = vld [vmem:[%s2] sm:$0xff]
        %589 = vset.pattern.permute.xlu0 0
        %590 = vperm.xlu0 %589, %v587
        %v591 = vpop.permute.xlu0 %590
        %593 = vmatprep.subr.mxu0 %v556
        %594 = vmatpush1.msra.mxu0 %v555
        %595 = vmatprep.subr.mxu0 %v558
        %596 = vmatpush1.msra.mxu0 %v557
        %597 = vmatprep.subr.mxu0 %v560
        %598 = vmatpush1.msra.mxu0 %v559
        %599 = vmatprep.subr.mxu0 %v562
        %600 = vmatpush1.msra.mxu0 %v561
        %601 = vmatprep.subr.mxu0 %v564
        %602 = vmatpush1.msra.mxu0 %v563
        %603 = vmatprep.subr.mxu0 %v566
        %604 = vmatpush1.msra.mxu0 %v565
        %605 = vmatprep.subr.mxu0 %v568
        %606 = vmatpush1.msra.mxu0 %v567
        %607 = vmatprep.subr.mxu0 %v570
        %608 = vmatpush1.msra.mxu0 %v569
        %609 = vmatprep.subr.mxu0 %v572
        %610 = vmatpush1.msra.mxu0 %v571
        %611 = vmatprep.subr.mxu0 %v574
        %612 = vmatpush1.msra.mxu0 %v573
        %613 = vmatprep.subr.mxu0 %v576
        %614 = vmatpush1.msra.mxu0 %v575
        %615 = vmatprep.subr.mxu0 %v578
        %616 = vmatpush1.msra.mxu0 %v577
        %617 = vmatprep.subr.mxu0 %v580
        %618 = vmatpush1.msra.mxu0 %v579
        %619 = vmatprep.subr.mxu0 %v582
        %620 = vmatpush1.msra.mxu0 %v581
        %621 = vmatprep.subr.mxu0 %v584
        %622 = vmatpush1.msra.mxu0 %v583
        %623 = vmatprep.subr.mxu0 %v586
        %624 = vmatpush1.msra.mxu0 %v585
        %625 = vmatprep.subr.mxu0 0.0
        %626 = vmatpush1.msra.mxu0 0.0
        %627 = vmatprep.subr.mxu0 0.0
        %628 = vmatpush1.msra.mxu0 0.0
        %629 = vmatprep.subr.mxu0 0.0
        %630 = vmatpush1.msra.mxu0 0.0
        %631 = vmatprep.subr.mxu0 0.0
        %632 = vmatpush1.msra.mxu0 0.0
        %633 = vmatprep.subr.mxu0 0.0
        %634 = vmatpush1.msra.mxu0 0.0
        %635 = vmatprep.subr.mxu0 0.0
        %636 = vmatpush1.msra.mxu0 0.0
        %637 = vmatprep.subr.mxu0 0.0
        %638 = vmatpush1.msra.mxu0 0.0
        %639 = vmatprep.subr.mxu0 0.0
        %640 = vmatpush1.msra.mxu0 0.0
        %641 = vmatprep.subr.mxu0 0.0
        %642 = vmatpush1.msra.mxu0 0.0
        %643 = vmatprep.subr.mxu0 0.0
        %644 = vmatpush1.msra.mxu0 0.0
        %645 = vmatprep.subr.mxu0 0.0
        %646 = vmatpush1.msra.mxu0 0.0
        %647 = vmatprep.subr.mxu0 0.0
        %648 = vmatpush1.msra.mxu0 0.0
        %649 = vmatprep.subr.mxu0 0.0
        %650 = vmatpush1.msra.mxu0 0.0
        %651 = vmatprep.subr.mxu0 0.0
        %652 = vmatpush1.msra.mxu0 0.0
        %653 = vmatprep.subr.mxu0 0.0
        %654 = vmatpush1.msra.mxu0 0.0
        %655 = vmatprep.subr.mxu0 0.0
        %656 = vmatpush1.msra.mxu0 0.0
        %657 = vmatprep.mubr.f32.mxu0 0.0
        %658 = vmatmul.mubr.f32.gmra.mrb[0].mxu0 %v554
        %v659 = vpop.f32.mrb[0].mxu0
        %v660 = vadd.f32 %v591, %v659
        %v661 = vpop.f32.mrb[0].mxu0
        %v662 = vadd.f32 %v591, %v661
        %663 = vdwg.mxu0
        %664 = vst [vmem:[%s186] sm:$0xff] %v660
        %665 = vst [vmem:[%s186 + $0x8] sm:$0xff] %v662
        %s666 = sand.u32 %s96, 1
        %s667 = scalar_lea.sflag [#allocation6], %s666
        %s668 = sand.u32 %s96, 1
        %s669 = smul.addr %s668, 16
        %s670 = scalar_lea.vmem [#allocation7], %s669
        // Predicated region
        $region37: #{tpu_custom_call.1} parent=31 // pred_check
          %p671 = pneg %p106
        $region38: #{tpu_custom_call.1} parent=31 // pred_check_branch
          %673 = sbr.rel (%p671) target = $region40
        $region39: #{tpu_custom_call.1} parent=31 // pred_region
          %s675 = ssub.s32 256, 256
          %676 = vsyncadd %s667, %s675
          %s677 = smul.addr %s20, 2
          %s678 = smul.addr %s677, 128
          %s679 = scalar_lea.hbm %s3, %s678
          %s681 = sshll.u32 %s670, 4
          %s682 = int_to_ptr.vmem [resolvable:$true] %s681
          %684 = dma.vmem_to_hbm [thread:$0]  %s682, 256, %s679, %s667
        $region40: #{tpu_custom_call.1} parent=31 // pred_fallthru
          _
      $region32: #{tpu_custom_call.1} parent=5 // pred_fallthru
        _
      %p685 = scmp.le.s32.totalorder 2, %s15
      // Predicated region
      $region41: #{tpu_custom_call.1} parent=5 // pred_check
        %p686 = pneg %p685
      $region42: #{tpu_custom_call.1} parent=5 // pred_check_branch
        %688 = sbr.rel (%p686) target = $region44
      $region43: #{tpu_custom_call.1} parent=5 // pred_region
        %s689 = ssub.s32 %s15, 2
        // Predicated region
        $region45: #{tpu_custom_call.1} parent=43 // pred_check
          %p690 = pneg %p112
        $region46: #{tpu_custom_call.1} parent=43 // pred_check_branch
          %692 = sbr.rel (%p690) target = $region48
        $region47: #{tpu_custom_call.1} parent=43 // pred_region
          %s693 = sand.u32 %s97, 1
          %s694 = scalar_lea.sflag [#allocation6], %s693
          %s695 = sand.u32 %s97, 1
          %s696 = smul.addr %s695, 16
          %s697 = scalar_lea.vmem [#allocation7], %s696
          %698 = dma.done %s694, 256
        $region48: #{tpu_custom_call.1} parent=43 // pred_fallthru
          _
      $region44: #{tpu_custom_call.1} parent=5 // pred_fallthru
        _
    $region6: #{tpu_custom_call.1} parent=1 // loop_footer
      %s19 = sadd.s32 1, %s15
    $region7: #{tpu_custom_call.1} parent=1 // loop_footer_branch
      %14 = sbr.rel target = $region3
    $region8: #{tpu_custom_call.1} parent=1 // loop_exit
      _
    %699 = vsyncpa [#allocation5], 1
    %s700 = scalar_lea.sflag [#allocation5], 1
    %701 = vsyncpa %s700, 1
    %702 = vsyncpa [#allocation6], 1
    %s703 = scalar_lea.sflag [#allocation6], 1
    %704 = vsyncpa %s703, 1

</llo_original>
